<compile_context>
chip_gen: v6e
topology: v6e:2x2x1
jax: 0.10.0
libtpu: 0.0.40
codegen_flags: <defaults>
</compile_context>

<pallas_src>
import functools

import jax
import jax.numpy as jnp
from jax.experimental import pallas as pl
from jax.experimental.pallas import tpu as pltpu

_CHUNK = 256  # lane-chunk processed per (fully unrolled) inner iteration


def _nerf_small_kernel(x_ref, w0_ref, w1_ref, w2_ref, o_ref):
    # x_ref:  (ch_pad, TM)      bf16  -- points along the lane axis
    # w0_ref: (hidden, ch_pad)  bf16  -- PyTorch (out, in) layout, zero-padded in-dim
    # w1_ref: (hidden, hidden)  bf16
    # w2_ref: (hidden, 1)       f32   -- last layer as a column (VPU/XLU path)
    # o_ref:  (1, TM)           f32   -- lane-dense output
    w0 = w0_ref[...]
    w1 = w1_ref[...]
    w2c = w2_ref[...]                       # (hidden, 1) f32
    num_chunks = x_ref.shape[1] // _CHUNK   # static (from block shape)

    # Static unroll: chunks are independent, so live ranges are bounded by the
    # dataflow and the scheduler can pipeline MXU/VPU/XLU work across chunks.
    for c in range(num_chunks):
        col = c * _CHUNK                    # static, 128-lane aligned
        xc = x_ref[:, pl.ds(col, _CHUNK)]   # (ch_pad, CHUNK) bf16

        # Layer 0 (MXU): (hidden, ch_pad) @ (ch_pad, CHUNK); ReLU on the f32
        # accumulator with the bf16 downcast fused (v5e has no bf16 VALU).
        h = jnp.dot(w0, xc, preferred_element_type=jnp.float32)
        h = jnp.maximum(h, 0.0).astype(jnp.bfloat16)            # (hidden, CHUNK)

        # Layer 1 (MXU): (hidden, hidden) @ (hidden, CHUNK); keep f32 for the
        # final reduction.
        h = jnp.dot(w1, h, preferred_element_type=jnp.float32)
        h = jnp.maximum(h, 0.0)                                  # (hidden, CHUNK) f32

        # Layer 2: M=1 matmul replaced by VPU broadcast-multiply + XLU
        # sublane-reduce so it overlaps with the MXU work of other chunks.
        out = jnp.sum(h * w2c, axis=0, keepdims=True)            # (1, CHUNK) f32
        o_ref[:, pl.ds(col, _CHUNK)] = jnp.maximum(out, 0.0)     # final ReLU


@functools.partial(jax.jit, static_argnames=("tm",))
def nerf_small_forward(x, w0, w1, w2, *, tm=8192):
    """Forward pass of NeRFSmall's sigma_net.

    x : (N, input_ch) float array (PyTorch layout, points along rows)
    w0: (hidden, input_ch)  nn.Linear weight (out, in), bias=False
    w1: (hidden, hidden)
    w2: (1, hidden)
    Returns sigma of shape (N, 1), float32.
    """
    n, input_ch = x.shape
    hidden = w0.shape[0]
    assert w0.shape == (hidden, input_ch)
    assert w1.shape == (hidden, hidden)
    assert w2.shape == (1, hidden)

    # Pad the (tiny) feature axis to a multiple of 8 sublanes.
    ch_pad = max(8, -(-input_ch // 8) * 8)

    # Tile selection: large tiles amortize per-grid-step overhead; shrink for
    # small N so we don't over-pad and so n_blocks >= 2 when N allows it
    # (keeps both v7x TensorCores busy via the "parallel" axis).
    tm = max(_CHUNK, (tm // _CHUNK) * _CHUNK)
    tm_eff = int(min(tm, max(_CHUNK, pl.next_power_of_2(pl.cdiv(n, 2)))))
    n_blocks = pl.cdiv(n, tm_eff)
    n_pad = n_blocks * tm_eff

    # Single fused HBM pass over x (pad + transpose + bf16 cast fuse under jit).
    # Padded columns produce garbage-free zeros through the bias-free net and
    # are sliced off below regardless.
    x_t = jnp.pad(x, ((0, n_pad - n), (0, ch_pad - input_ch))).T.astype(jnp.bfloat16)
    w0b = jnp.pad(w0, ((0, 0), (0, ch_pad - input_ch))).astype(jnp.bfloat16)
    w1b = w1.astype(jnp.bfloat16)
    w2c = w2.astype(jnp.float32).T          # (hidden, 1), used on the VPU in f32

    flops = 2 * n * (input_ch * hidden + hidden * hidden + hidden * 1)
    bytes_accessed = (n * input_ch * 2                      # bf16 input
                      + n * 4                               # f32 output
                      + 2 * (w0b.size + w1b.size) + 4 * w2c.size)
    cost = pl.CostEstimate(flops=flops, transcendentals=0,
                           bytes_accessed=bytes_accessed)

    out = pl.pallas_call(
        _nerf_small_kernel,
        out_shape=jax.ShapeDtypeStruct((1, n_pad), jnp.float32),
        grid_spec=pltpu.PrefetchScalarGridSpec(
            num_scalar_prefetch=0,
            grid=(n_blocks,),
            in_specs=[
                # x tile: padded feature axis on sublanes, tm_eff points on
                # lanes -> aligned, lane-dense contiguous DMA rows.
                pl.BlockSpec((ch_pad, tm_eff), lambda i: (0, i)),
                # Weights: full arrays, same block every grid step.
                pl.BlockSpec((hidden, ch_pad), lambda i: (0, 0)),
                pl.BlockSpec((hidden, hidden), lambda i: (0, 0)),
                pl.BlockSpec((hidden, 1), lambda i: (0, 0)),
            ],
            out_specs=pl.BlockSpec((1, tm_eff), lambda i: (0, i)),
        ),
        compiler_params=pltpu.CompilerParams(
            dimension_semantics=("parallel",),   # shards across v7x's 2 TCs
        ),
        cost_estimate=cost,
    )(x_t, w0b, w1b, w2c)

    # (1, n_pad) -> (N, 1) to match the PyTorch forward output shape.
    return out[:, :n].T


def _reference_forward_f32(x, w0, w1, w2):
    h = jnp.maximum(x @ w0.T, 0.0)
    h = jnp.maximum(h @ w1.T, 0.0)
    h = jnp.maximum(h @ w2.T, 0.0)
    return h


def _reference_forward_bf16(x, w0, w1, w2):
    # Same mixed-precision recipe as the kernel (bf16 operands, f32 accum).
    xb = x.astype(jnp.bfloat16)
    w0b = w0.astype(jnp.bfloat16)
    w1b = w1.astype(jnp.bfloat16)
    w2b = w2.astype(jnp.bfloat16)
    h = jnp.maximum(jnp.dot(xb, w0b.T, preferred_element_type=jnp.float32), 0.0)
    h = jnp.maximum(jnp.dot(h.astype(jnp.bfloat16), w1b.T,
                            preferred_element_type=jnp.float32), 0.0)
    h = jnp.maximum(jnp.dot(h.astype(jnp.bfloat16), w2b.T,
                            preferred_element_type=jnp.float32), 0.0)
    return h


if __name__ == "__main__":
    # Module hyperparameters (defaults of NeRFSmall).
    hidden_dim = 64
    input_ch = 3

    key = jax.random.PRNGKey(0)
    kx, k0, k1, k2 = jax.random.split(key, 4)

    # Small deterministic example: N points with 3 input channels.
    # N = 2048 -> the wrapper picks tm_eff = 1024 so the parallel grid axis
    # has 2 steps (feeds both v7x TensorCores).
    N = 2048
    x = jax.random.normal(kx, (N, input_ch), dtype=jnp.float32)

    # Deterministic synthetic weights, PyTorch nn.Linear layout (out, in).
    w0 = jax.random.normal(k0, (hidden_dim, input_ch), dtype=jnp.float32) * 0.1
    w1 = jax.random.normal(k1, (hidden_dim, hidden_dim), dtype=jnp.float32) * 0.1
    w2 = jax.random.normal(k2, (1, hidden_dim), dtype=jnp.float32) * 0.1

    sigma = nerf_small_forward(x, w0, w1, w2)
    sigma = jax.block_until_ready(sigma)
    assert sigma.shape == (N, 1)

    # Tight check against a reference using the same bf16/f32-accum recipe.
    ref_bf16 = _reference_forward_bf16(x, w0, w1, w2)
    assert jnp.allclose(sigma, ref_bf16, atol=1e-2, rtol=1e-2), (
        float(jnp.max(jnp.abs(sigma - ref_bf16))))

    # Loose check against the pure-f32 PyTorch semantics.
    ref_f32 = _reference_forward_f32(x, w0, w1, w2)
    assert jnp.allclose(sigma, ref_f32, atol=5e-2, rtol=5e-2), (
        float(jnp.max(jnp.abs(sigma - ref_f32))))

    print("KERNEL_OK")
</pallas_src>

<mosaic_0001>
module attributes {stable_mosaic.version = 11 : i64} {
  func.func @_nerf_small_kernel(%arg0: i32, %arg1: memref<8x1024xbf16, #tpu.memory_space<vmem>>, %arg2: memref<64x8xbf16, #tpu.memory_space<vmem>>, %arg3: memref<64x64xbf16, #tpu.memory_space<vmem>>, %arg4: memref<64x1xf32, #tpu.memory_space<vmem>>, %arg5: memref<1x1024xf32, #tpu.memory_space<vmem>>) attributes {dimension_semantics = [#tpu.dimension_semantics<parallel>], iteration_bounds = array<i64: 2>, scalar_prefetch = 0 : i64, scratch_operands = 0 : i64, tpu.core_type = #tpu.core_type<tc>, window_params = [{transform_indices = @transform_0, window_bounds = array<i64: 8, 1024>}, {pipeline_mode = #tpu.pipeline_mode<synchronous>, transform_indices = @transform_1, window_bounds = array<i64: 64, 8>}, {pipeline_mode = #tpu.pipeline_mode<synchronous>, transform_indices = @transform_2, window_bounds = array<i64: 64, 64>}, {pipeline_mode = #tpu.pipeline_mode<synchronous>, transform_indices = @transform_3, window_bounds = array<i64: 64, 1>}, {transform_indices = @transform_4, window_bounds = array<i64: 1, 1024>}]} {
    %c0 = arith.constant 0 : index
    %c0_0 = arith.constant 0 : index
    %0 = vector.load %arg2[%c0, %c0_0] : memref<64x8xbf16, #tpu.memory_space<vmem>>, vector<64x8xbf16>
    %c0_1 = arith.constant 0 : index
    %c0_2 = arith.constant 0 : index
    %1 = vector.load %arg3[%c0_1, %c0_2] : memref<64x64xbf16, #tpu.memory_space<vmem>>, vector<64x64xbf16>
    %c0_3 = arith.constant 0 : index
    %c0_4 = arith.constant 0 : index
    %2 = vector.load %arg4[%c0_3, %c0_4] : memref<64x1xf32, #tpu.memory_space<vmem>>, vector<64x1xf32>
    %c0_5 = arith.constant 0 : index
    %c0_6 = arith.constant 0 : index
    %3 = vector.load %arg1[%c0_5, %c0_6] : memref<8x1024xbf16, #tpu.memory_space<vmem>>, vector<8x256xbf16>
    %cst = arith.constant dense<0.000000e+00> : vector<64x256xf32>
    %4 = tpu.matmul %0, %3, %cst {dimension_numbers = #tpu.dot_dimension_numbers<[1], [0], [0], [1], [0, 0, 1, 1], [], []>} : vector<64x8xbf16>, vector<8x256xbf16>, vector<64x256xf32> -> vector<64x256xf32>
    %cst_7 = arith.constant 0.000000e+00 : f32
    %5 = vector.broadcast %cst_7 : f32 to vector<64x256xf32>
    %6 = arith.maximumf %4, %5 : vector<64x256xf32>
    %7 = arith.truncf %6 : vector<64x256xf32> to vector<64x256xbf16>
    %cst_8 = arith.constant dense<0.000000e+00> : vector<64x256xf32>
    %8 = tpu.matmul %1, %7, %cst_8 {dimension_numbers = #tpu.dot_dimension_numbers<[1], [0], [0], [1], [0, 0, 1, 1], [], []>} : vector<64x64xbf16>, vector<64x256xbf16>, vector<64x256xf32> -> vector<64x256xf32>
    %cst_9 = arith.constant 0.000000e+00 : f32
    %9 = vector.broadcast %cst_9 : f32 to vector<64x256xf32>
    %10 = arith.maximumf %8, %9 : vector<64x256xf32>
    %11 = vector.broadcast %2 : vector<64x1xf32> to vector<64x256xf32>
    %12 = arith.mulf %10, %11 : vector<64x256xf32>
    %cst_10 = arith.constant dense<0.000000e+00> : vector<256xf32>
    %13 = vector.multi_reduction <add>, %12, %cst_10 [0] : vector<64x256xf32> to vector<256xf32>
    %14 = vector.shape_cast %13 : vector<256xf32> to vector<1x256xf32>
    %cst_11 = arith.constant 0.000000e+00 : f32
    %15 = vector.broadcast %cst_11 : f32 to vector<1x256xf32>
    %16 = arith.maximumf %14, %15 : vector<1x256xf32>
    %c0_12 = arith.constant 0 : index
    %c0_13 = arith.constant 0 : index
    %17 = vector.load %arg5[%c0_12, %c0_13] : memref<1x1024xf32, #tpu.memory_space<vmem>>, vector<1x256xf32>
    tpu.vector_store %arg5[%c0_12, %c0_13], %16 {strides = array<i32>} : memref<1x1024xf32, #tpu.memory_space<vmem>>, vector<1x256xf32>,
    %c0_14 = arith.constant 0 : index
    %c256 = arith.constant 256 : index
    %18 = vector.load %arg1[%c0_14, %c256] : memref<8x1024xbf16, #tpu.memory_space<vmem>>, vector<8x256xbf16>
    %cst_15 = arith.constant dense<0.000000e+00> : vector<64x256xf32>
    %19 = tpu.matmul %0, %18, %cst_15 {dimension_numbers = #tpu.dot_dimension_numbers<[1], [0], [0], [1], [0, 0, 1, 1], [], []>} : vector<64x8xbf16>, vector<8x256xbf16>, vector<64x256xf32> -> vector<64x256xf32>
    %cst_16 = arith.constant 0.000000e+00 : f32
    %20 = vector.broadcast %cst_16 : f32 to vector<64x256xf32>
    %21 = arith.maximumf %19, %20 : vector<64x256xf32>
    %22 = arith.truncf %21 : vector<64x256xf32> to vector<64x256xbf16>
    %cst_17 = arith.constant dense<0.000000e+00> : vector<64x256xf32>
    %23 = tpu.matmul %1, %22, %cst_17 {dimension_numbers = #tpu.dot_dimension_numbers<[1], [0], [0], [1], [0, 0, 1, 1], [], []>} : vector<64x64xbf16>, vector<64x256xbf16>, vector<64x256xf32> -> vector<64x256xf32>
    %cst_18 = arith.constant 0.000000e+00 : f32
    %24 = vector.broadcast %cst_18 : f32 to vector<64x256xf32>
    %25 = arith.maximumf %23, %24 : vector<64x256xf32>
    %26 = vector.broadcast %2 : vector<64x1xf32> to vector<64x256xf32>
    %27 = arith.mulf %25, %26 : vector<64x256xf32>
    %cst_19 = arith.constant dense<0.000000e+00> : vector<256xf32>
    %28 = vector.multi_reduction <add>, %27, %cst_19 [0] : vector<64x256xf32> to vector<256xf32>
    %29 = vector.shape_cast %28 : vector<256xf32> to vector<1x256xf32>
    %cst_20 = arith.constant 0.000000e+00 : f32
    %30 = vector.broadcast %cst_20 : f32 to vector<1x256xf32>
    %31 = arith.maximumf %29, %30 : vector<1x256xf32>
    %c0_21 = arith.constant 0 : index
    %c256_22 = arith.constant 256 : index
    %32 = vector.load %arg5[%c0_21, %c256_22] : memref<1x1024xf32, #tpu.memory_space<vmem>>, vector<1x256xf32>
    tpu.vector_store %arg5[%c0_21, %c256_22], %31 {strides = array<i32>} : memref<1x1024xf32, #tpu.memory_space<vmem>>, vector<1x256xf32>,
    %c0_23 = arith.constant 0 : index
    %c512 = arith.constant 512 : index
    %33 = vector.load %arg1[%c0_23, %c512] : memref<8x1024xbf16, #tpu.memory_space<vmem>>, vector<8x256xbf16>
    %cst_24 = arith.constant dense<0.000000e+00> : vector<64x256xf32>
    %34 = tpu.matmul %0, %33, %cst_24 {dimension_numbers = #tpu.dot_dimension_numbers<[1], [0], [0], [1], [0, 0, 1, 1], [], []>} : vector<64x8xbf16>, vector<8x256xbf16>, vector<64x256xf32> -> vector<64x256xf32>
    %cst_25 = arith.constant 0.000000e+00 : f32
    %35 = vector.broadcast %cst_25 : f32 to vector<64x256xf32>
    %36 = arith.maximumf %34, %35 : vector<64x256xf32>
    %37 = arith.truncf %36 : vector<64x256xf32> to vector<64x256xbf16>
    %cst_26 = arith.constant dense<0.000000e+00> : vector<64x256xf32>
    %38 = tpu.matmul %1, %37, %cst_26 {dimension_numbers = #tpu.dot_dimension_numbers<[1], [0], [0], [1], [0, 0, 1, 1], [], []>} : vector<64x64xbf16>, vector<64x256xbf16>, vector<64x256xf32> -> vector<64x256xf32>
    %cst_27 = arith.constant 0.000000e+00 : f32
    %39 = vector.broadcast %cst_27 : f32 to vector<64x256xf32>
    %40 = arith.maximumf %38, %39 : vector<64x256xf32>
    %41 = vector.broadcast %2 : vector<64x1xf32> to vector<64x256xf32>
    %42 = arith.mulf %40, %41 : vector<64x256xf32>
    %cst_28 = arith.constant dense<0.000000e+00> : vector<256xf32>
    %43 = vector.multi_reduction <add>, %42, %cst_28 [0] : vector<64x256xf32> to vector<256xf32>
    %44 = vector.shape_cast %43 : vector<256xf32> to vector<1x256xf32>
    %cst_29 = arith.constant 0.000000e+00 : f32
    %45 = vector.broadcast %cst_29 : f32 to vector<1x256xf32>
    %46 = arith.maximumf %44, %45 : vector<1x256xf32>
    %c0_30 = arith.constant 0 : index
    %c512_31 = arith.constant 512 : index
    %47 = vector.load %arg5[%c0_30, %c512_31] : memref<1x1024xf32, #tpu.memory_space<vmem>>, vector<1x256xf32>
    tpu.vector_store %arg5[%c0_30, %c512_31], %46 {strides = array<i32>} : memref<1x1024xf32, #tpu.memory_space<vmem>>, vector<1x256xf32>,
    %c0_32 = arith.constant 0 : index
    %c768 = arith.constant 768 : index
    %48 = vector.load %arg1[%c0_32, %c768] : memref<8x1024xbf16, #tpu.memory_space<vmem>>, vector<8x256xbf16>
    %cst_33 = arith.constant dense<0.000000e+00> : vector<64x256xf32>
    %49 = tpu.matmul %0, %48, %cst_33 {dimension_numbers = #tpu.dot_dimension_numbers<[1], [0], [0], [1], [0, 0, 1, 1], [], []>} : vector<64x8xbf16>, vector<8x256xbf16>, vector<64x256xf32> -> vector<64x256xf32>
    %cst_34 = arith.constant 0.000000e+00 : f32
    %50 = vector.broadcast %cst_34 : f32 to vector<64x256xf32>
    %51 = arith.maximumf %49, %50 : vector<64x256xf32>
    %52 = arith.truncf %51 : vector<64x256xf32> to vector<64x256xbf16>
    %cst_35 = arith.constant dense<0.000000e+00> : vector<64x256xf32>
    %53 = tpu.matmul %1, %52, %cst_35 {dimension_numbers = #tpu.dot_dimension_numbers<[1], [0], [0], [1], [0, 0, 1, 1], [], []>} : vector<64x64xbf16>, vector<64x256xbf16>, vector<64x256xf32> -> vector<64x256xf32>
    %cst_36 = arith.constant 0.000000e+00 : f32
    %54 = vector.broadcast %cst_36 : f32 to vector<64x256xf32>
    %55 = arith.maximumf %53, %54 : vector<64x256xf32>
    %56 = vector.broadcast %2 : vector<64x1xf32> to vector<64x256xf32>
    %57 = arith.mulf %55, %56 : vector<64x256xf32>
    %cst_37 = arith.constant dense<0.000000e+00> : vector<256xf32>
    %58 = vector.multi_reduction <add>, %57, %cst_37 [0] : vector<64x256xf32> to vector<256xf32>
    %59 = vector.shape_cast %58 : vector<256xf32> to vector<1x256xf32>
    %cst_38 = arith.constant 0.000000e+00 : f32
    %60 = vector.broadcast %cst_38 : f32 to vector<1x256xf32>
    %61 = arith.maximumf %59, %60 : vector<1x256xf32>
    %c0_39 = arith.constant 0 : index
    %c768_40 = arith.constant 768 : index
    %62 = vector.load %arg5[%c0_39, %c768_40] : memref<1x1024xf32, #tpu.memory_space<vmem>>, vector<1x256xf32>
    tpu.vector_store %arg5[%c0_39, %c768_40], %61 {strides = array<i32>} : memref<1x1024xf32, #tpu.memory_space<vmem>>, vector<1x256xf32>,
    return
  }
  func.func @transform_0(%arg0: i32) -> (i32, i32) {
    %c0_i32 = arith.constant 0 : i32
    %c0_i32_0 = arith.constant 0 : i32
    return %c0_i32, %arg0 : i32, i32
  }
  func.func @transform_1(%arg0: i32) -> (i32, i32) {
    %c0_i32 = arith.constant 0 : i32
    %c0_i32_0 = arith.constant 0 : i32
    %c0_i32_1 = arith.constant 0 : i32
    return %c0_i32, %c0_i32_0 : i32, i32
  }
  func.func @transform_2(%arg0: i32) -> (i32, i32) {
    %c0_i32 = arith.constant 0 : i32
    %c0_i32_0 = arith.constant 0 : i32
    %c0_i32_1 = arith.constant 0 : i32
    return %c0_i32, %c0_i32_0 : i32, i32
  }
  func.func @transform_3(%arg0: i32) -> (i32, i32) {
    %c0_i32 = arith.constant 0 : i32
    %c0_i32_0 = arith.constant 0 : i32
    %c0_i32_1 = arith.constant 0 : i32
    return %c0_i32, %c0_i32_0 : i32, i32
  }
  func.func @transform_4(%arg0: i32) -> (i32, i32) {
    %c0_i32 = arith.constant 0 : i32
    %c0_i32_0 = arith.constant 0 : i32
    return %c0_i32, %arg0 : i32, i32
  }
}

</mosaic_0001>

<llo_original>
// kernel: nerf_small_forward.1
$region0: #{nerf_small_forward.1}
  #allocation0 [shape = 'u32[]', space=smem, size = 0x4, offset = 0x4, fixed_abs, tag = 'smem constant byte address 0x4 - core index']
  #allocation1 [shape = 'u32[144,128]{1,0:T(1,128)}', space=vmem, size = 0x12000, scoped, tag = 'internal scratch']
  %s0 = inlined_call_operand.vmem [shape: bf16[8,2048], index: 0, kind: input, shape index: {}]
  %s1 = inlined_call_operand.vmem [shape: bf16[64,8], index: 1, kind: input, shape index: {}]
  %s2 = inlined_call_operand.vmem [shape: bf16[64,64], index: 2, kind: input, shape index: {}]
  %s3 = inlined_call_operand.vmem [shape: f32[64,1], index: 3, kind: input, shape index: {}]
  %s4 = inlined_call_operand.hbm [shape: f32[1,2048], index: 4, kind: output, shape index: {}]
  %s5 = sld [smem:[#allocation0]]
  $region49: #{nerf_small_forward.1} parent=0
    _
  %s7 = ssub.s32 1, %s5
  %s8 = scalar_select 0, %s7, %s5
  $region1: #{nerf_small_forward.1} parent=0
    #allocation2 [shape = 'u8[8192]{0}', space=vmem, size = 0x2000, scoped, tag = 'output window, operand 0']
    #allocation3 [shape = 's32[2]{0}', space=sflag, size = 0x8, scoped, tag = 'scoped memory for nerf_small_forward.1']
    %9 = vsyncpa [#allocation3], 0
    %s10 = scalar_lea.sflag [#allocation3], 1
    %11 = vsyncpa %s10, 0
    loop: start=0, step=1, limit=4
    $region2: #{nerf_small_forward.1} parent=1 // loop_pre_header
      _
    $region3: #{nerf_small_forward.1} parent=1 // loop_header
      %s13 = sphi 0, %s17
      %p14 = scmp.ge.s32.totalorder %s13, 4
      %s23 = sphi 0, %s25
      %s26 = sphi 0, %s23
      %s27 = sphi 0, %s26
      %s43 = sphi 0, %s27
      %s47 = sphi 0, %s47
      %s49 = sphi 0, %s47
      %s50 = sphi 0, %s49
      %s64 = sphi 0, %s50
      %s68 = sphi 0, %s68
      %s70 = sphi 0, %s68
      %s71 = sphi 0, %s70
      %s85 = sphi 0, %s71
      %s89 = sphi 0, %s89
      %s91 = sphi 0, %s89
      %s92 = sphi 0, %s91
      %s106 = sphi 0, %s92
      %s112 = sphi 0, %s114
      %s115 = sphi 0, %s112
      %s116 = sphi 0, %s115
      %s132 = sphi 0, %s116
    $region4: #{nerf_small_forward.1} parent=1 // loop_header_branch
      %16 = sbr.rel (%p14) target = $region8
    $region5: #{nerf_small_forward.1} parent=1 // loop_body
      %s18 = ssub.s32 %s13, 1
      %s19 = ssub.s32 %s13, 2
      %s20 = sadd.s32 %s13, 1
      %s21 = ssub.s32 %s13, %s20
      %p22 = scmp.eq.s32.totalorder %s21, 0
      %s24 = sadd.s32 %s23, 1
      %s25 = scalar_select %p22, %s23, %s24
      %p28 = pneg %p22
      %p29 = scmp.eq.s32.totalorder %s13, 1
      %p30 = por %p28, %p29
      %p31 = scmp.ne.s32.totalorder %s23, %s26
      %p32 = scmp.eq.s32.totalorder %s13, 0
      %p33 = por %p31, %p32
      %p34 = scmp.ne.s32.totalorder %s23, %s26
      %p35 = scmp.eq.s32.totalorder %s18, 1
      %p36 = por %p34, %p35
      %p37 = scmp.ne.s32.totalorder %s26, %s27
      %p38 = scmp.eq.s32.totalorder %s18, 0
      %p39 = por %p37, %p38
      %p40 = scmp.ne.s32.totalorder %s26, %s27
      %p41 = scmp.eq.s32.totalorder %s19, 1
      %p42 = por %p40, %p41
      %p44 = scmp.ne.s32.totalorder %s27, %s43
      %p45 = scmp.eq.s32.totalorder %s19, 0
      %p46 = por %p44, %p45
      %s48 = sadd.s32 %s47, 1
      %p51 = scmp.eq.s32.totalorder %s13, 1
      %p52 = scmp.ne.s32.totalorder %s47, %s49
      %p53 = scmp.eq.s32.totalorder %s13, 0
      %p54 = por %p52, %p53
      %p55 = scmp.ne.s32.totalorder %s47, %s49
      %p56 = scmp.eq.s32.totalorder %s18, 1
      %p57 = por %p55, %p56
      %p58 = scmp.ne.s32.totalorder %s49, %s50
      %p59 = scmp.eq.s32.totalorder %s18, 0
      %p60 = por %p58, %p59
      %p61 = scmp.ne.s32.totalorder %s49, %s50
      %p62 = scmp.eq.s32.totalorder %s19, 1
      %p63 = por %p61, %p62
      %p65 = scmp.ne.s32.totalorder %s50, %s64
      %p66 = scmp.eq.s32.totalorder %s19, 0
      %p67 = por %p65, %p66
      %s69 = sadd.s32 %s68, 1
      %p72 = scmp.eq.s32.totalorder %s13, 1
      %p73 = scmp.ne.s32.totalorder %s68, %s70
      %p74 = scmp.eq.s32.totalorder %s13, 0
      %p75 = por %p73, %p74
      %p76 = scmp.ne.s32.totalorder %s68, %s70
      %p77 = scmp.eq.s32.totalorder %s18, 1
      %p78 = por %p76, %p77
      %p79 = scmp.ne.s32.totalorder %s70, %s71
      %p80 = scmp.eq.s32.totalorder %s18, 0
      %p81 = por %p79, %p80
      %p82 = scmp.ne.s32.totalorder %s70, %s71
      %p83 = scmp.eq.s32.totalorder %s19, 1
      %p84 = por %p82, %p83
      %p86 = scmp.ne.s32.totalorder %s71, %s85
      %p87 = scmp.eq.s32.totalorder %s19, 0
      %p88 = por %p86, %p87
      %s90 = sadd.s32 %s89, 1
      %p93 = scmp.eq.s32.totalorder %s13, 1
      %p94 = scmp.ne.s32.totalorder %s89, %s91
      %p95 = scmp.eq.s32.totalorder %s13, 0
      %p96 = por %p94, %p95
      %p97 = scmp.ne.s32.totalorder %s89, %s91
      %p98 = scmp.eq.s32.totalorder %s18, 1
      %p99 = por %p97, %p98
      %p100 = scmp.ne.s32.totalorder %s91, %s92
      %p101 = scmp.eq.s32.totalorder %s18, 0
      %p102 = por %p100, %p101
      %p103 = scmp.ne.s32.totalorder %s91, %s92
      %p104 = scmp.eq.s32.totalorder %s19, 1
      %p105 = por %p103, %p104
      %p107 = scmp.ne.s32.totalorder %s92, %s106
      %p108 = scmp.eq.s32.totalorder %s19, 0
      %p109 = por %p107, %p108
      %s110 = ssub.s32 %s13, %s20
      %p111 = scmp.eq.s32.totalorder %s110, 0
      %s113 = sadd.s32 %s112, 1
      %s114 = scalar_select %p111, %s112, %s113
      %p117 = pneg %p111
      %p118 = scmp.eq.s32.totalorder %s13, 1
      %p119 = por %p117, %p118
      %p120 = scmp.ne.s32.totalorder %s112, %s115
      %p121 = scmp.eq.s32.totalorder %s13, 0
      %p122 = por %p120, %p121
      %p123 = scmp.ne.s32.totalorder %s112, %s115
      %p124 = scmp.eq.s32.totalorder %s18, 1
      %p125 = por %p123, %p124
      %p126 = scmp.ne.s32.totalorder %s115, %s116
      %p127 = scmp.eq.s32.totalorder %s18, 0
      %p128 = por %p126, %p127
      %p129 = scmp.ne.s32.totalorder %s115, %s116
      %p130 = scmp.eq.s32.totalorder %s19, 1
      %p131 = por %p129, %p130
      %p133 = scmp.ne.s32.totalorder %s116, %s132
      %p134 = scmp.eq.s32.totalorder %s19, 0
      %p135 = por %p133, %p134
      %p136 = scmp.le.s32.totalorder 1, %s13
      %p137 = scmp.lt.s32.totalorder %s13, 3
      %p138 = pnand %p136, %p137
      %p139 = pneg %p138
      // Predicated region
      $region9: #{nerf_small_forward.1} parent=5 // pred_check
        _
      $region10: #{nerf_small_forward.1} parent=5 // pred_check_branch
        %141 = sbr.rel (%p138) target = $region12
      $region11: #{nerf_small_forward.1} parent=5 // pred_region
        %s142 = ssub.s32 %s13, 1
        // Predicated region
        $region13: #{nerf_small_forward.1} parent=11 // pred_check
          %p143 = pneg %p60
        $region14: #{nerf_small_forward.1} parent=11 // pred_check_branch
          %145 = sbr.rel (%p143) target = $region16
        $region15: #{nerf_small_forward.1} parent=11 // pred_region
          _
        $region16: #{nerf_small_forward.1} parent=11 // pred_fallthru
          _
        // Predicated region
        $region17: #{nerf_small_forward.1} parent=11 // pred_check
          %p146 = pneg %p81
        $region18: #{nerf_small_forward.1} parent=11 // pred_check_branch
          %148 = sbr.rel (%p146) target = $region20
        $region19: #{nerf_small_forward.1} parent=11 // pred_region
          _
        $region20: #{nerf_small_forward.1} parent=11 // pred_fallthru
          _
        // Predicated region
        $region21: #{nerf_small_forward.1} parent=11 // pred_check
          %p149 = pneg %p102
        $region22: #{nerf_small_forward.1} parent=11 // pred_check_branch
          %151 = sbr.rel (%p149) target = $region24
        $region23: #{nerf_small_forward.1} parent=11 // pred_region
          _
        $region24: #{nerf_small_forward.1} parent=11 // pred_fallthru
          _
      $region12: #{nerf_small_forward.1} parent=5 // pred_fallthru
        _
      %p152 = scmp.lt.s32.totalorder %s13, 2
      // Predicated region
      $region25: #{nerf_small_forward.1} parent=5 // pred_check
        %p153 = pneg %p152
      $region26: #{nerf_small_forward.1} parent=5 // pred_check_branch
        %155 = sbr.rel (%p153) target = $region28
      $region27: #{nerf_small_forward.1} parent=5 // pred_region
        // Predicated region
        $region29: #{nerf_small_forward.1} parent=27 // pred_check
          %p156 = pneg %p33
        $region30: #{nerf_small_forward.1} parent=27 // pred_check_branch
          %158 = sbr.rel (%p156) target = $region32
        $region31: #{nerf_small_forward.1} parent=27 // pred_region
          %s159 = smul.u32 8, %s13
          %p160 = scmp.lt.s32.totalorder %s159, 15
          %s161 = scalar_select %p160, %s159, 15
          %s162 = smul.addr %s161, 4
          %s163 = scalar_lea.vmem %s0, %s162
          %s164 = smul.u32 8, %s13
        $region32: #{nerf_small_forward.1} parent=27 // pred_fallthru
          _
      $region28: #{nerf_small_forward.1} parent=5 // pred_fallthru
        _
      %p165 = scmp.le.s32.totalorder 1, %s13
      %p166 = scmp.lt.s32.totalorder %s13, 3
      %p167 = pnand %p165, %p166
      %p168 = pneg %p167
      // Predicated region
      $region33: #{nerf_small_forward.1} parent=5 // pred_check
        _
      $region34: #{nerf_small_forward.1} parent=5 // pred_check_branch
        %170 = sbr.rel (%p167) target = $region36
      $region35: #{nerf_small_forward.1} parent=5 // pred_region
        %s171 = ssub.s32 %s13, 1
        %s172 = smul.u32 8, %s18
        %p173 = scmp.lt.s32.totalorder %s172, 15
        %s174 = scalar_select %p173, %s172, 15
        %s175 = smul.addr %s174, 4
        %s176 = scalar_lea.vmem %s0, %s175
        %p177 = pneg %p39
        %p178 = pneg %p36
        %p179 = pneg %p60
        %p180 = pneg %p57
        %p181 = pneg %p81
        %p182 = pneg %p78
        %p183 = pneg %p102
        %p184 = pneg %p99
        %p185 = pneg %p128
        %p186 = pneg %p125
        %s187 = sand.u32 %s115, 1
        %s188 = scalar_lea.sflag [#allocation3], %s187
        %s189 = sand.u32 %s115, 1
        %s190 = smul.addr %s189, 8
        %s191 = scalar_lea.vmem [#allocation2], %s190
        %s192 = smul.u32 8, %s18
        %p193 = scmp.lt.s32.totalorder %s192, 15
        %s194 = scalar_select %p193, %s192, 15
        %s195 = smul.addr %s194, 4
        %s196 = scalar_lea.vmem %s0, %s195
        %s197 = smul.u32 8, %s18
        %s198 = smul.u32 8, %s18
        %v200 = vld [vmem:[%s1] sm:$0xf]
        %v201 = vld [vmem:[%s1 + $0x4] sm:$0xf]
        %v202 = vld [vmem:[%s1 + $0x8] sm:$0xf]
        %v203 = vld [vmem:[%s1 + $0xc] sm:$0xf]
        %v204 = vld [vmem:[%s1 + $0x10] sm:$0xf]
        %v205 = vld [vmem:[%s1 + $0x14] sm:$0xf]
        %v206 = vld [vmem:[%s1 + $0x18] sm:$0xf]
        %v207 = vld [vmem:[%s1 + $0x1c] sm:$0xf]
        %v208 = vld [vmem:[%s2] sm:$0xf]
        %v209 = vld [vmem:[%s2 + $0x4] sm:$0xf]
        %v210 = vld [vmem:[%s2 + $0x8] sm:$0xf]
        %v211 = vld [vmem:[%s2 + $0xc] sm:$0xf]
        %v212 = vld [vmem:[%s2 + $0x10] sm:$0xf]
        %v213 = vld [vmem:[%s2 + $0x14] sm:$0xf]
        %v214 = vld [vmem:[%s2 + $0x18] sm:$0xf]
        %v215 = vld [vmem:[%s2 + $0x1c] sm:$0xf]
        %v216 = vld [vmem:[%s3] sm:$0xff]
        %v217 = vld [vmem:[%s3 + $0x8] sm:$0xff]
        %v218 = vld [vmem:[%s3 + $0x10] sm:$0xff]
        %v219 = vld [vmem:[%s3 + $0x18] sm:$0xff]
        %v220 = vld [vmem:[%s3 + $0x20] sm:$0xff]
        %v221 = vld [vmem:[%s3 + $0x28] sm:$0xff]
        %v222 = vld [vmem:[%s3 + $0x30] sm:$0xff]
        %v223 = vld [vmem:[%s3 + $0x38] sm:$0xff]
        %v224 = vld [vmem:[%s196] sm:$0xff]
        %v233 = vunpack.c.l.b16 %v200
        %v234 = vunpack.c.l.b16 %v201
        %v235 = vunpack.c.l.b16 %v202
        %v236 = vunpack.c.l.b16 %v203
        %v237 = vunpack.c.l.b16 %v204
        %v238 = vunpack.c.l.b16 %v205
        %v239 = vunpack.c.l.b16 %v206
        %v240 = vunpack.c.l.b16 %v207
        %v241 = vpack.c.b16 %v234, %v233
        %v242 = vpack.c.b16 %v236, %v235
        %v243 = vpack.c.b16 %v238, %v237
        %v244 = vpack.c.b16 %v240, %v239
        %v246 = vunpack.c.l.b16 %v224
        %v247 = vunpack.c.h.b16 %v224
        %v248 = vpack.c.b16 %v246, %v246
        %v249 = vpack.c.b16 %v247, %v247
        %vm250 = vcmask 64512
        %v252 = vsel %vm250, %v241, 0
        %v255 = vsel %vm250, %v242, 0
        %v258 = vsel %vm250, %v243, 0
        %v261 = vsel %vm250, %v244, 0
        %vm263 = vcmask 1043456
        %v265 = vsel %vm263, %v248, 0
        %v268 = vsel %vm263, %v249, 0
        %270 = vmatprep.subr.bf16.mxu0 0
        %271 = vmatpush1.bf16.msra.mxu0 0
        %272 = vmatprep.subr.bf16.mxu0 0
        %273 = vmatpush1.bf16.msra.mxu0 0
        %274 = vmatprep.subr.bf16.mxu0 0
        %275 = vmatpush1.bf16.msra.mxu0 0
        %276 = vmatprep.subr.bf16.mxu0 0
        %277 = vmatpush1.bf16.msra.mxu0 0
        %278 = vmatprep.subr.bf16.mxu0 0
        %279 = vmatpush1.bf16.msra.mxu0 0
        %280 = vmatprep.subr.bf16.mxu0 0
        %281 = vmatpush1.bf16.msra.mxu0 0
        %282 = vmatprep.subr.bf16.mxu0 0
        %283 = vmatpush1.bf16.msra.mxu0 0
        %284 = vmatprep.subr.bf16.mxu0 %v268
        %285 = vmatpush1.bf16.msra.mxu0 %v265
        %286 = vmatprep.subr.bf16.mxu0 0
        %287 = vmatpush2.bf16.msra.mxu0 0
        %288 = vmatprep.subr.bf16.mxu0 0
        %289 = vmatpush2.bf16.msra.mxu0 0
        %290 = vmatprep.subr.bf16.mxu0 0
        %291 = vmatpush2.bf16.msra.mxu0 0
        %292 = vmatprep.subr.bf16.mxu0 0
        %293 = vmatpush2.bf16.msra.mxu0 0
        %294 = vmatprep.subr.bf16.mxu0 0
        %295 = vmatpush2.bf16.msra.mxu0 0
        %296 = vmatprep.subr.bf16.mxu0 0
        %297 = vmatpush2.bf16.msra.mxu0 0
        %298 = vmatprep.subr.bf16.mxu0 0
        %299 = vmatpush2.bf16.msra.mxu0 0
        %300 = vmatprep.subr.bf16.mxu0 0
        %301 = vmatpush2.bf16.msra.mxu0 0
        %302 = vmatprep.mubr.bf16.mxu0 0
        %303 = vmatmul.mubr.bf16.gmra.mxu0 %v252
        %v304 = vpop.f32.mrf.mxu0
        %v305 = vadd.f32 0.0, %v304
        %v306 = vpop.f32.mrf.mxu0
        %v307 = vadd.f32 0.0, %v306
        %v308 = vpop.f32.mrf.mxu0
        %v309 = vadd.f32 0.0, %v308
        %v310 = vpop.f32.mrf.mxu0
        %v311 = vadd.f32 0.0, %v310
        %312 = vmatprep.mubr.bf16.mxu0 0
        %313 = vmatmul.mubr.bf16.gmra.mxu0 %v255
        %v314 = vpop.f32.mrf.mxu0
        %v315 = vadd.f32 0.0, %v314
        %v316 = vpop.f32.mrf.mxu0
        %v317 = vadd.f32 0.0, %v316
        %v318 = vpop.f32.mrf.mxu0
        %v319 = vadd.f32 0.0, %v318
        %v320 = vpop.f32.mrf.mxu0
        %v321 = vadd.f32 0.0, %v320
        %322 = vmatprep.mubr.bf16.mxu0 0
        %323 = vmatmul.mubr.bf16.gmra.mxu0 %v258
        %v324 = vpop.f32.mrf.mxu0
        %v325 = vadd.f32 0.0, %v324
        %v326 = vpop.f32.mrf.mxu0
        %v327 = vadd.f32 0.0, %v326
        %v328 = vpop.f32.mrf.mxu0
        %v329 = vadd.f32 0.0, %v328
        %v330 = vpop.f32.mrf.mxu0
        %v331 = vadd.f32 0.0, %v330
        %332 = vmatprep.mubr.bf16.mxu0 0
        %333 = vmatmul.mubr.bf16.gmra.mxu0 %v261
        %v334 = vpop.f32.mrf.mxu0
        %v335 = vadd.f32 0.0, %v334
        %v336 = vpop.f32.mrf.mxu0
        %v337 = vadd.f32 0.0, %v336
        %v338 = vpop.f32.mrf.mxu0
        %v339 = vadd.f32 0.0, %v338
        %v340 = vpop.f32.mrf.mxu0
        %v341 = vadd.f32 0.0, %v340
        %342 = vdwg.mxu0
        %v343 = vmax.f32 %v305, 0.0
        %v344 = vmax.f32 %v307, 0.0
        %v345 = vmax.f32 %v309, 0.0
        %v346 = vmax.f32 %v311, 0.0
        %v347 = vmax.f32 %v315, 0.0
        %v348 = vmax.f32 %v317, 0.0
        %v349 = vmax.f32 %v319, 0.0
        %v350 = vmax.f32 %v321, 0.0
        %v351 = vmax.f32 %v325, 0.0
        %v352 = vmax.f32 %v327, 0.0
        %v353 = vmax.f32 %v329, 0.0
        %v354 = vmax.f32 %v331, 0.0
        %v355 = vmax.f32 %v335, 0.0
        %v356 = vmax.f32 %v337, 0.0
        %v357 = vmax.f32 %v339, 0.0
        %v358 = vmax.f32 %v341, 0.0
        %v359 = vpack.c.bf16 %v345, %v343
        %v360 = vpack.c.bf16 %v346, %v344
        %v361 = vpack.c.bf16 %v349, %v347
        %v362 = vpack.c.bf16 %v350, %v348
        %v363 = vpack.c.bf16 %v353, %v351
        %v364 = vpack.c.bf16 %v354, %v352
        %v365 = vpack.c.bf16 %v357, %v355
        %v366 = vpack.c.bf16 %v358, %v356
        %v375 = vunpack.c.l.b16 %v208
        %v376 = vunpack.c.l.b16 %v209
        %v377 = vunpack.c.l.b16 %v210
        %v378 = vunpack.c.l.b16 %v211
        %v379 = vunpack.c.l.b16 %v212
        %v380 = vunpack.c.l.b16 %v213
        %v381 = vunpack.c.l.b16 %v214
        %v382 = vunpack.c.l.b16 %v215
        %v383 = vpack.c.b16 %v376, %v375
        %v384 = vpack.c.b16 %v378, %v377
        %v385 = vpack.c.b16 %v380, %v379
        %v386 = vpack.c.b16 %v382, %v381
        %vm387 = vcmask 523264
        %v389 = vsel %vm387, %v383, 0
        %v392 = vsel %vm387, %v384, 0
        %v395 = vsel %vm387, %v385, 0
        %v398 = vsel %vm387, %v386, 0
        %400 = vmatprep.subr.bf16.mxu0 0
        %401 = vmatpush1.bf16.msra.mxu0 0
        %402 = vmatprep.subr.bf16.mxu0 0
        %403 = vmatpush1.bf16.msra.mxu0 0
        %404 = vmatprep.subr.bf16.mxu0 0
        %405 = vmatpush1.bf16.msra.mxu0 0
        %406 = vmatprep.subr.bf16.mxu0 0
        %407 = vmatpush1.bf16.msra.mxu0 0
        %408 = vmatprep.subr.bf16.mxu0 %v366
        %409 = vmatpush1.bf16.msra.mxu0 %v365
        %410 = vmatprep.subr.bf16.mxu0 %v364
        %411 = vmatpush1.bf16.msra.mxu0 %v363
        %412 = vmatprep.subr.bf16.mxu0 %v362
        %413 = vmatpush1.bf16.msra.mxu0 %v361
        %414 = vmatprep.subr.bf16.mxu0 %v360
        %415 = vmatpush1.bf16.msra.mxu0 %v359
        %416 = vmatprep.subr.bf16.mxu0 0
        %417 = vmatpush2.bf16.msra.mxu0 0
        %418 = vmatprep.subr.bf16.mxu0 0
        %419 = vmatpush2.bf16.msra.mxu0 0
        %420 = vmatprep.subr.bf16.mxu0 0
        %421 = vmatpush2.bf16.msra.mxu0 0
        %422 = vmatprep.subr.bf16.mxu0 0
        %423 = vmatpush2.bf16.msra.mxu0 0
        %424 = vmatprep.subr.bf16.mxu0 0
        %425 = vmatpush2.bf16.msra.mxu0 0
        %426 = vmatprep.subr.bf16.mxu0 0
        %427 = vmatpush2.bf16.msra.mxu0 0
        %428 = vmatprep.subr.bf16.mxu0 0
        %429 = vmatpush2.bf16.msra.mxu0 0
        %430 = vmatprep.subr.bf16.mxu0 0
        %431 = vmatpush2.bf16.msra.mxu0 0
        %432 = vmatprep.mubr.bf16.mxu0 0
        %433 = vmatmul.mubr.bf16.gmra.mxu0 %v389
        %v434 = vpop.f32.mrf.mxu0
        %v435 = vadd.f32 0.0, %v434
        %v436 = vpop.f32.mrf.mxu0
        %v437 = vadd.f32 0.0, %v436
        %v438 = vpop.f32.mrf.mxu0
        %v439 = vadd.f32 0.0, %v438
        %v440 = vpop.f32.mrf.mxu0
        %v441 = vadd.f32 0.0, %v440
        %442 = vmatprep.mubr.bf16.mxu0 0
        %443 = vmatmul.mubr.bf16.gmra.mxu0 %v392
        %v444 = vpop.f32.mrf.mxu0
        %v445 = vadd.f32 0.0, %v444
        %v446 = vpop.f32.mrf.mxu0
        %v447 = vadd.f32 0.0, %v446
        %v448 = vpop.f32.mrf.mxu0
        %v449 = vadd.f32 0.0, %v448
        %v450 = vpop.f32.mrf.mxu0
        %v451 = vadd.f32 0.0, %v450
        %452 = vmatprep.mubr.bf16.mxu0 0
        %453 = vmatmul.mubr.bf16.gmra.mxu0 %v395
        %v454 = vpop.f32.mrf.mxu0
        %v455 = vadd.f32 0.0, %v454
        %v456 = vpop.f32.mrf.mxu0
        %v457 = vadd.f32 0.0, %v456
        %v458 = vpop.f32.mrf.mxu0
        %v459 = vadd.f32 0.0, %v458
        %v460 = vpop.f32.mrf.mxu0
        %v461 = vadd.f32 0.0, %v460
        %462 = vmatprep.mubr.bf16.mxu0 0
        %463 = vmatmul.mubr.bf16.gmra.mxu0 %v398
        %v464 = vpop.f32.mrf.mxu0
        %v465 = vadd.f32 0.0, %v464
        %v466 = vpop.f32.mrf.mxu0
        %v467 = vadd.f32 0.0, %v466
        %v468 = vpop.f32.mrf.mxu0
        %v469 = vadd.f32 0.0, %v468
        %v470 = vpop.f32.mrf.mxu0
        %v471 = vadd.f32 0.0, %v470
        %472 = vdwg.mxu0
        %v473 = vmax.f32 %v435, 0.0
        %v474 = vmax.f32 %v437, 0.0
        %v475 = vmax.f32 %v439, 0.0
        %v476 = vmax.f32 %v441, 0.0
        %v477 = vmax.f32 %v445, 0.0
        %v478 = vmax.f32 %v447, 0.0
        %v479 = vmax.f32 %v449, 0.0
        %v480 = vmax.f32 %v451, 0.0
        %v481 = vmax.f32 %v455, 0.0
        %v482 = vmax.f32 %v457, 0.0
        %v483 = vmax.f32 %v459, 0.0
        %v484 = vmax.f32 %v461, 0.0
        %v485 = vmax.f32 %v465, 0.0
        %v486 = vmax.f32 %v467, 0.0
        %v487 = vmax.f32 %v469, 0.0
        %v488 = vmax.f32 %v471, 0.0
        %490 = vset.pattern.permute.xlu0 0
        %491 = vperm.xlu0 %490, %v216
        %v492 = vpop.permute.xlu0 %491
        %495 = vset.pattern.permute.xlu0 0
        %496 = vperm.xlu0 %495, %v217
        %v497 = vpop.permute.xlu0 %496
        %500 = vset.pattern.permute.xlu0 0
        %501 = vperm.xlu0 %500, %v218
        %v502 = vpop.permute.xlu0 %501
        %505 = vset.pattern.permute.xlu0 0
        %506 = vperm.xlu0 %505, %v219
        %v507 = vpop.permute.xlu0 %506
        %510 = vset.pattern.permute.xlu0 0
        %511 = vperm.xlu0 %510, %v220
        %v512 = vpop.permute.xlu0 %511
        %515 = vset.pattern.permute.xlu0 0
        %516 = vperm.xlu0 %515, %v221
        %v517 = vpop.permute.xlu0 %516
        %520 = vset.pattern.permute.xlu0 0
        %521 = vperm.xlu0 %520, %v222
        %v522 = vpop.permute.xlu0 %521
        %525 = vset.pattern.permute.xlu0 0
        %526 = vperm.xlu0 %525, %v223
        %v527 = vpop.permute.xlu0 %526
        %v529 = vmul.f32 %v473, %v492
        %v530 = vmul.f32 %v474, %v492
        %v531 = vmul.f32 %v475, %v497
        %v532 = vmul.f32 %v476, %v497
        %v533 = vmul.f32 %v477, %v502
        %v534 = vmul.f32 %v478, %v502
        %v535 = vmul.f32 %v479, %v507
        %v536 = vmul.f32 %v480, %v507
        %v537 = vmul.f32 %v481, %v512
        %v538 = vmul.f32 %v482, %v512
        %v539 = vmul.f32 %v483, %v517
        %v540 = vmul.f32 %v484, %v517
        %v541 = vmul.f32 %v485, %v522
        %v542 = vmul.f32 %v486, %v522
        %v543 = vmul.f32 %v487, %v527
        %v544 = vmul.f32 %v488, %v527
        %v545 = vadd.f32 %v529, %v531
        %v546 = vadd.f32 %v545, %v533
        %v547 = vadd.f32 %v546, %v535
        %v548 = vadd.f32 %v547, %v537
        %v549 = vadd.f32 %v548, %v539
        %v550 = vadd.f32 %v549, %v541
        %v551 = vadd.f32 %v550, %v543
        %v552 = vrot.slane %v551, 4
        %v553 = vadd.f32 %v551, %v552
        %v554 = vrot.slane %v553, 2
        %v555 = vadd.f32 %v553, %v554
        %v556 = vrot.slane %v555, 1
        %v557 = vadd.f32 %v555, %v556
        %v558 = vadd.f32 %v530, %v532
        %v559 = vadd.f32 %v558, %v534
        %v560 = vadd.f32 %v559, %v536
        %v561 = vadd.f32 %v560, %v538
        %v562 = vadd.f32 %v561, %v540
        %v563 = vadd.f32 %v562, %v542
        %v564 = vadd.f32 %v563, %v544
        %v565 = vrot.slane %v564, 4
        %v566 = vadd.f32 %v564, %v565
        %v567 = vrot.slane %v566, 2
        %v568 = vadd.f32 %v566, %v567
        %v569 = vrot.slane %v568, 1
        %v570 = vadd.f32 %v568, %v569
        %v571 = vmax.f32 %v557, 0.0
        %v572 = vmax.f32 %v570, 0.0
        %v575 = vcombine.low %v571, %v572
        %v577 = vunpack.c.l.s4 1966171168
        %v578 = vunpack.c.0.s8 %v577
        %v579 = vlaneseq
        %v580 = vshrl.u32 %v579, 7
        %v581 = vsub.s32 %v578, %v580
        %v582 = vrot.slane %v575, %v581
        %v584 = vunpack.c.l.s4 1966171168
        %v585 = vunpack.c.0.s8 %v584
        %v586 = vlaneseq
        %v587 = vshrl.u32 %v586, 7
        %v588 = vsub.s32 %v585, %v587
        %v589 = vrot.slane %v582, %v588
        %v591 = vlaneseq
        %vm592 = vcmp.ge.s32.totalorder %v591, 0
        %vm593 = vcmp.lt.s32.totalorder %v591, 256
        %vm594 = vmand %vm592, %vm593
        %595 = vst.msk [vmem:[%s191] sm:$0x3] %vm594, %v589
        %v596 = vld [vmem:[%s196 + $0x8] sm:$0xff]
        %v598 = vunpack.c.l.b16 %v596
        %v599 = vunpack.c.h.b16 %v596
        %v600 = vpack.c.b16 %v598, %v598
        %v601 = vpack.c.b16 %v599, %v599
        %v603 = vsel %vm263, %v600, 0
        %v606 = vsel %vm263, %v601, 0
        %608 = vmatprep.subr.bf16.mxu0 0
        %609 = vmatpush1.bf16.msra.mxu0 0
        %610 = vmatprep.subr.bf16.mxu0 0
        %611 = vmatpush1.bf16.msra.mxu0 0
        %612 = vmatprep.subr.bf16.mxu0 0
        %613 = vmatpush1.bf16.msra.mxu0 0
        %614 = vmatprep.subr.bf16.mxu0 0
        %615 = vmatpush1.bf16.msra.mxu0 0
        %616 = vmatprep.subr.bf16.mxu0 0
        %617 = vmatpush1.bf16.msra.mxu0 0
        %618 = vmatprep.subr.bf16.mxu0 0
        %619 = vmatpush1.bf16.msra.mxu0 0
        %620 = vmatprep.subr.bf16.mxu0 0
        %621 = vmatpush1.bf16.msra.mxu0 0
        %622 = vmatprep.subr.bf16.mxu0 %v606
        %623 = vmatpush1.bf16.msra.mxu0 %v603
        %624 = vmatprep.subr.bf16.mxu0 0
        %625 = vmatpush2.bf16.msra.mxu0 0
        %626 = vmatprep.subr.bf16.mxu0 0
        %627 = vmatpush2.bf16.msra.mxu0 0
        %628 = vmatprep.subr.bf16.mxu0 0
        %629 = vmatpush2.bf16.msra.mxu0 0
        %630 = vmatprep.subr.bf16.mxu0 0
        %631 = vmatpush2.bf16.msra.mxu0 0
        %632 = vmatprep.subr.bf16.mxu0 0
        %633 = vmatpush2.bf16.msra.mxu0 0
        %634 = vmatprep.subr.bf16.mxu0 0
        %635 = vmatpush2.bf16.msra.mxu0 0
        %636 = vmatprep.subr.bf16.mxu0 0
        %637 = vmatpush2.bf16.msra.mxu0 0
        %638 = vmatprep.subr.bf16.mxu0 0
        %639 = vmatpush2.bf16.msra.mxu0 0
        %640 = vmatprep.mubr.bf16.mxu0 0
        %641 = vmatmul.mubr.bf16.gmra.mxu0 %v252
        %v642 = vpop.f32.mrf.mxu0
        %v643 = vadd.f32 0.0, %v642
        %v644 = vpop.f32.mrf.mxu0
        %v645 = vadd.f32 0.0, %v644
        %v646 = vpop.f32.mrf.mxu0
        %v647 = vadd.f32 0.0, %v646
        %v648 = vpop.f32.mrf.mxu0
        %v649 = vadd.f32 0.0, %v648
        %650 = vmatprep.mubr.bf16.mxu0 0
        %651 = vmatmul.mubr.bf16.gmra.mxu0 %v255
        %v652 = vpop.f32.mrf.mxu0
        %v653 = vadd.f32 0.0, %v652
        %v654 = vpop.f32.mrf.mxu0
        %v655 = vadd.f32 0.0, %v654
        %v656 = vpop.f32.mrf.mxu0
        %v657 = vadd.f32 0.0, %v656
        %v658 = vpop.f32.mrf.mxu0
        %v659 = vadd.f32 0.0, %v658
        %660 = vmatprep.mubr.bf16.mxu0 0
        %661 = vmatmul.mubr.bf16.gmra.mxu0 %v258
        %v662 = vpop.f32.mrf.mxu0
        %v663 = vadd.f32 0.0, %v662
        %v664 = vpop.f32.mrf.mxu0
        %v665 = vadd.f32 0.0, %v664
        %v666 = vpop.f32.mrf.mxu0
        %v667 = vadd.f32 0.0, %v666
        %v668 = vpop.f32.mrf.mxu0
        %v669 = vadd.f32 0.0, %v668
        %670 = vmatprep.mubr.bf16.mxu0 0
        %671 = vmatmul.mubr.bf16.gmra.mxu0 %v261
        %v672 = vpop.f32.mrf.mxu0
        %v673 = vadd.f32 0.0, %v672
        %v674 = vpop.f32.mrf.mxu0
        %v675 = vadd.f32 0.0, %v674
        %v676 = vpop.f32.mrf.mxu0
        %v677 = vadd.f32 0.0, %v676
        %v678 = vpop.f32.mrf.mxu0
        %v679 = vadd.f32 0.0, %v678
        %680 = vdwg.mxu0
        %v681 = vmax.f32 %v643, 0.0
        %v682 = vmax.f32 %v645, 0.0
        %v683 = vmax.f32 %v647, 0.0
        %v684 = vmax.f32 %v649, 0.0
        %v685 = vmax.f32 %v653, 0.0
        %v686 = vmax.f32 %v655, 0.0
        %v687 = vmax.f32 %v657, 0.0
        %v688 = vmax.f32 %v659, 0.0
        %v689 = vmax.f32 %v663, 0.0
        %v690 = vmax.f32 %v665, 0.0
        %v691 = vmax.f32 %v667, 0.0
        %v692 = vmax.f32 %v669, 0.0
        %v693 = vmax.f32 %v673, 0.0
        %v694 = vmax.f32 %v675, 0.0
        %v695 = vmax.f32 %v677, 0.0
        %v696 = vmax.f32 %v679, 0.0
        %v697 = vpack.c.bf16 %v683, %v681
        %v698 = vpack.c.bf16 %v684, %v682
        %v699 = vpack.c.bf16 %v687, %v685
        %v700 = vpack.c.bf16 %v688, %v686
        %v701 = vpack.c.bf16 %v691, %v689
        %v702 = vpack.c.bf16 %v692, %v690
        %v703 = vpack.c.bf16 %v695, %v693
        %v704 = vpack.c.bf16 %v696, %v694
        %705 = vmatprep.subr.bf16.mxu0 0
        %706 = vmatpush1.bf16.msra.mxu0 0
        %707 = vmatprep.subr.bf16.mxu0 0
        %708 = vmatpush1.bf16.msra.mxu0 0
        %709 = vmatprep.subr.bf16.mxu0 0
        %710 = vmatpush1.bf16.msra.mxu0 0
        %711 = vmatprep.subr.bf16.mxu0 0
        %712 = vmatpush1.bf16.msra.mxu0 0
        %713 = vmatprep.subr.bf16.mxu0 %v704
        %714 = vmatpush1.bf16.msra.mxu0 %v703
        %715 = vmatprep.subr.bf16.mxu0 %v702
        %716 = vmatpush1.bf16.msra.mxu0 %v701
        %717 = vmatprep.subr.bf16.mxu0 %v700
        %718 = vmatpush1.bf16.msra.mxu0 %v699
        %719 = vmatprep.subr.bf16.mxu0 %v698
        %720 = vmatpush1.bf16.msra.mxu0 %v697
        %721 = vmatprep.subr.bf16.mxu0 0
        %722 = vmatpush2.bf16.msra.mxu0 0
        %723 = vmatprep.subr.bf16.mxu0 0
        %724 = vmatpush2.bf16.msra.mxu0 0
        %725 = vmatprep.subr.bf16.mxu0 0
        %726 = vmatpush2.bf16.msra.mxu0 0
        %727 = vmatprep.subr.bf16.mxu0 0
        %728 = vmatpush2.bf16.msra.mxu0 0
        %729 = vmatprep.subr.bf16.mxu0 0
        %730 = vmatpush2.bf16.msra.mxu0 0
        %731 = vmatprep.subr.bf16.mxu0 0
        %732 = vmatpush2.bf16.msra.mxu0 0
        %733 = vmatprep.subr.bf16.mxu0 0
        %734 = vmatpush2.bf16.msra.mxu0 0
        %735 = vmatprep.subr.bf16.mxu0 0
        %736 = vmatpush2.bf16.msra.mxu0 0
        %737 = vmatprep.mubr.bf16.mxu0 0
        %738 = vmatmul.mubr.bf16.gmra.mxu0 %v389
        %v739 = vpop.f32.mrf.mxu0
        %v740 = vadd.f32 0.0, %v739
        %v741 = vpop.f32.mrf.mxu0
        %v742 = vadd.f32 0.0, %v741
        %v743 = vpop.f32.mrf.mxu0
        %v744 = vadd.f32 0.0, %v743
        %v745 = vpop.f32.mrf.mxu0
        %v746 = vadd.f32 0.0, %v745
        %747 = vmatprep.mubr.bf16.mxu0 0
        %748 = vmatmul.mubr.bf16.gmra.mxu0 %v392
        %v749 = vpop.f32.mrf.mxu0
        %v750 = vadd.f32 0.0, %v749
        %v751 = vpop.f32.mrf.mxu0
        %v752 = vadd.f32 0.0, %v751
        %v753 = vpop.f32.mrf.mxu0
        %v754 = vadd.f32 0.0, %v753
        %v755 = vpop.f32.mrf.mxu0
        %v756 = vadd.f32 0.0, %v755
        %757 = vmatprep.mubr.bf16.mxu0 0
        %758 = vmatmul.mubr.bf16.gmra.mxu0 %v395
        %v759 = vpop.f32.mrf.mxu0
        %v760 = vadd.f32 0.0, %v759
        %v761 = vpop.f32.mrf.mxu0
        %v762 = vadd.f32 0.0, %v761
        %v763 = vpop.f32.mrf.mxu0
        %v764 = vadd.f32 0.0, %v763
        %v765 = vpop.f32.mrf.mxu0
        %v766 = vadd.f32 0.0, %v765
        %767 = vmatprep.mubr.bf16.mxu0 0
        %768 = vmatmul.mubr.bf16.gmra.mxu0 %v398
        %v769 = vpop.f32.mrf.mxu0
        %v770 = vadd.f32 0.0, %v769
        %v771 = vpop.f32.mrf.mxu0
        %v772 = vadd.f32 0.0, %v771
        %v773 = vpop.f32.mrf.mxu0
        %v774 = vadd.f32 0.0, %v773
        %v775 = vpop.f32.mrf.mxu0
        %v776 = vadd.f32 0.0, %v775
        %777 = vdwg.mxu0
        %v778 = vmax.f32 %v740, 0.0
        %v779 = vmax.f32 %v742, 0.0
        %v780 = vmax.f32 %v744, 0.0
        %v781 = vmax.f32 %v746, 0.0
        %v782 = vmax.f32 %v750, 0.0
        %v783 = vmax.f32 %v752, 0.0
        %v784 = vmax.f32 %v754, 0.0
        %v785 = vmax.f32 %v756, 0.0
        %v786 = vmax.f32 %v760, 0.0
        %v787 = vmax.f32 %v762, 0.0
        %v788 = vmax.f32 %v764, 0.0
        %v789 = vmax.f32 %v766, 0.0
        %v790 = vmax.f32 %v770, 0.0
        %v791 = vmax.f32 %v772, 0.0
        %v792 = vmax.f32 %v774, 0.0
        %v793 = vmax.f32 %v776, 0.0
        %v794 = vmul.f32 %v778, %v492
        %v795 = vmul.f32 %v779, %v492
        %v796 = vmul.f32 %v780, %v497
        %v797 = vmul.f32 %v781, %v497
        %v798 = vmul.f32 %v782, %v502
        %v799 = vmul.f32 %v783, %v502
        %v800 = vmul.f32 %v784, %v507
        %v801 = vmul.f32 %v785, %v507
        %v802 = vmul.f32 %v786, %v512
        %v803 = vmul.f32 %v787, %v512
        %v804 = vmul.f32 %v788, %v517
        %v805 = vmul.f32 %v789, %v517
        %v806 = vmul.f32 %v790, %v522
        %v807 = vmul.f32 %v791, %v522
        %v808 = vmul.f32 %v792, %v527
        %v809 = vmul.f32 %v793, %v527
        %v810 = vadd.f32 %v794, %v796
        %v811 = vadd.f32 %v810, %v798
        %v812 = vadd.f32 %v811, %v800
        %v813 = vadd.f32 %v812, %v802
        %v814 = vadd.f32 %v813, %v804
        %v815 = vadd.f32 %v814, %v806
        %v816 = vadd.f32 %v815, %v808
        %v817 = vrot.slane %v816, 4
        %v818 = vadd.f32 %v816, %v817
        %v819 = vrot.slane %v818, 2
        %v820 = vadd.f32 %v818, %v819
        %v821 = vrot.slane %v820, 1
        %v822 = vadd.f32 %v820, %v821
        %v823 = vadd.f32 %v795, %v797
        %v824 = vadd.f32 %v823, %v799
        %v825 = vadd.f32 %v824, %v801
        %v826 = vadd.f32 %v825, %v803
        %v827 = vadd.f32 %v826, %v805
        %v828 = vadd.f32 %v827, %v807
        %v829 = vadd.f32 %v828, %v809
        %v830 = vrot.slane %v829, 4
        %v831 = vadd.f32 %v829, %v830
        %v832 = vrot.slane %v831, 2
        %v833 = vadd.f32 %v831, %v832
        %v834 = vrot.slane %v833, 1
        %v835 = vadd.f32 %v833, %v834
        %v836 = vmax.f32 %v822, 0.0
        %v837 = vmax.f32 %v835, 0.0
        %v840 = vcombine.low %v836, %v837
        %v842 = vunpack.c.l.s4 1966171168
        %v843 = vunpack.c.0.s8 %v842
        %v844 = vlaneseq
        %v845 = vshrl.u32 %v844, 7
        %v846 = vsub.s32 %v843, %v845
        %v847 = vrot.slane %v840, %v846
        %v849 = vunpack.c.l.s4 1966171168
        %v850 = vunpack.c.0.s8 %v849
        %v851 = vlaneseq
        %v852 = vshrl.u32 %v851, 7
        %v853 = vsub.s32 %v850, %v852
        %v854 = vrot.slane %v847, %v853
        %856 = vst.msk [vmem:[%s191 + $0x2] sm:$0x3] %vm594, %v854
        %v857 = vld [vmem:[%s196 + $0x10] sm:$0xff]
        %v859 = vunpack.c.l.b16 %v857
        %v860 = vunpack.c.h.b16 %v857
        %v861 = vpack.c.b16 %v859, %v859
        %v862 = vpack.c.b16 %v860, %v860
        %v864 = vsel %vm263, %v861, 0
        %v867 = vsel %vm263, %v862, 0
        %869 = vmatprep.subr.bf16.mxu0 0
        %870 = vmatpush1.bf16.msra.mxu0 0
        %871 = vmatprep.subr.bf16.mxu0 0
        %872 = vmatpush1.bf16.msra.mxu0 0
        %873 = vmatprep.subr.bf16.mxu0 0
        %874 = vmatpush1.bf16.msra.mxu0 0
        %875 = vmatprep.subr.bf16.mxu0 0
        %876 = vmatpush1.bf16.msra.mxu0 0
        %877 = vmatprep.subr.bf16.mxu0 0
        %878 = vmatpush1.bf16.msra.mxu0 0
        %879 = vmatprep.subr.bf16.mxu0 0
        %880 = vmatpush1.bf16.msra.mxu0 0
        %881 = vmatprep.subr.bf16.mxu0 0
        %882 = vmatpush1.bf16.msra.mxu0 0
        %883 = vmatprep.subr.bf16.mxu0 %v867
        %884 = vmatpush1.bf16.msra.mxu0 %v864
        %885 = vmatprep.subr.bf16.mxu0 0
        %886 = vmatpush2.bf16.msra.mxu0 0
        %887 = vmatprep.subr.bf16.mxu0 0
        %888 = vmatpush2.bf16.msra.mxu0 0
        %889 = vmatprep.subr.bf16.mxu0 0
        %890 = vmatpush2.bf16.msra.mxu0 0
        %891 = vmatprep.subr.bf16.mxu0 0
        %892 = vmatpush2.bf16.msra.mxu0 0
        %893 = vmatprep.subr.bf16.mxu0 0
        %894 = vmatpush2.bf16.msra.mxu0 0
        %895 = vmatprep.subr.bf16.mxu0 0
        %896 = vmatpush2.bf16.msra.mxu0 0
        %897 = vmatprep.subr.bf16.mxu0 0
        %898 = vmatpush2.bf16.msra.mxu0 0
        %899 = vmatprep.subr.bf16.mxu0 0
        %900 = vmatpush2.bf16.msra.mxu0 0
        %901 = vmatprep.mubr.bf16.mxu0 0
        %902 = vmatmul.mubr.bf16.gmra.mxu0 %v252
        %v903 = vpop.f32.mrf.mxu0
        %v904 = vadd.f32 0.0, %v903
        %v905 = vpop.f32.mrf.mxu0
        %v906 = vadd.f32 0.0, %v905
        %v907 = vpop.f32.mrf.mxu0
        %v908 = vadd.f32 0.0, %v907
        %v909 = vpop.f32.mrf.mxu0
        %v910 = vadd.f32 0.0, %v909
        %911 = vmatprep.mubr.bf16.mxu0 0
        %912 = vmatmul.mubr.bf16.gmra.mxu0 %v255
        %v913 = vpop.f32.mrf.mxu0
        %v914 = vadd.f32 0.0, %v913
        %v915 = vpop.f32.mrf.mxu0
        %v916 = vadd.f32 0.0, %v915
        %v917 = vpop.f32.mrf.mxu0
        %v918 = vadd.f32 0.0, %v917
        %v919 = vpop.f32.mrf.mxu0
        %v920 = vadd.f32 0.0, %v919
        %921 = vmatprep.mubr.bf16.mxu0 0
        %922 = vmatmul.mubr.bf16.gmra.mxu0 %v258
        %v923 = vpop.f32.mrf.mxu0
        %v924 = vadd.f32 0.0, %v923
        %v925 = vpop.f32.mrf.mxu0
        %v926 = vadd.f32 0.0, %v925
        %v927 = vpop.f32.mrf.mxu0
        %v928 = vadd.f32 0.0, %v927
        %v929 = vpop.f32.mrf.mxu0
        %v930 = vadd.f32 0.0, %v929
        %931 = vmatprep.mubr.bf16.mxu0 0
        %932 = vmatmul.mubr.bf16.gmra.mxu0 %v261
        %v933 = vpop.f32.mrf.mxu0
        %v934 = vadd.f32 0.0, %v933
        %v935 = vpop.f32.mrf.mxu0
        %v936 = vadd.f32 0.0, %v935
        %v937 = vpop.f32.mrf.mxu0
        %v938 = vadd.f32 0.0, %v937
        %v939 = vpop.f32.mrf.mxu0
        %v940 = vadd.f32 0.0, %v939
        %941 = vdwg.mxu0
        %v942 = vmax.f32 %v904, 0.0
        %v943 = vmax.f32 %v906, 0.0
        %v944 = vmax.f32 %v908, 0.0
        %v945 = vmax.f32 %v910, 0.0
        %v946 = vmax.f32 %v914, 0.0
        %v947 = vmax.f32 %v916, 0.0
        %v948 = vmax.f32 %v918, 0.0
        %v949 = vmax.f32 %v920, 0.0
        %v950 = vmax.f32 %v924, 0.0
        %v951 = vmax.f32 %v926, 0.0
        %v952 = vmax.f32 %v928, 0.0
        %v953 = vmax.f32 %v930, 0.0
        %v954 = vmax.f32 %v934, 0.0
        %v955 = vmax.f32 %v936, 0.0
        %v956 = vmax.f32 %v938, 0.0
        %v957 = vmax.f32 %v940, 0.0
        %v958 = vpack.c.bf16 %v944, %v942
        %v959 = vpack.c.bf16 %v945, %v943
        %v960 = vpack.c.bf16 %v948, %v946
        %v961 = vpack.c.bf16 %v949, %v947
        %v962 = vpack.c.bf16 %v952, %v950
        %v963 = vpack.c.bf16 %v953, %v951
        %v964 = vpack.c.bf16 %v956, %v954
        %v965 = vpack.c.bf16 %v957, %v955
        %966 = vmatprep.subr.bf16.mxu0 0
        %967 = vmatpush1.bf16.msra.mxu0 0
        %968 = vmatprep.subr.bf16.mxu0 0
        %969 = vmatpush1.bf16.msra.mxu0 0
        %970 = vmatprep.subr.bf16.mxu0 0
        %971 = vmatpush1.bf16.msra.mxu0 0
        %972 = vmatprep.subr.bf16.mxu0 0
        %973 = vmatpush1.bf16.msra.mxu0 0
        %974 = vmatprep.subr.bf16.mxu0 %v965
        %975 = vmatpush1.bf16.msra.mxu0 %v964
        %976 = vmatprep.subr.bf16.mxu0 %v963
        %977 = vmatpush1.bf16.msra.mxu0 %v962
        %978 = vmatprep.subr.bf16.mxu0 %v961
        %979 = vmatpush1.bf16.msra.mxu0 %v960
        %980 = vmatprep.subr.bf16.mxu0 %v959
        %981 = vmatpush1.bf16.msra.mxu0 %v958
        %982 = vmatprep.subr.bf16.mxu0 0
        %983 = vmatpush2.bf16.msra.mxu0 0
        %984 = vmatprep.subr.bf16.mxu0 0
        %985 = vmatpush2.bf16.msra.mxu0 0
        %986 = vmatprep.subr.bf16.mxu0 0
        %987 = vmatpush2.bf16.msra.mxu0 0
        %988 = vmatprep.subr.bf16.mxu0 0
        %989 = vmatpush2.bf16.msra.mxu0 0
        %990 = vmatprep.subr.bf16.mxu0 0
        %991 = vmatpush2.bf16.msra.mxu0 0
        %992 = vmatprep.subr.bf16.mxu0 0
        %993 = vmatpush2.bf16.msra.mxu0 0
        %994 = vmatprep.subr.bf16.mxu0 0
        %995 = vmatpush2.bf16.msra.mxu0 0
        %996 = vmatprep.subr.bf16.mxu0 0
        %997 = vmatpush2.bf16.msra.mxu0 0
        %998 = vmatprep.mubr.bf16.mxu0 0
        %999 = vmatmul.mubr.bf16.gmra.mxu0 %v389
        %v1000 = vpop.f32.mrf.mxu0
        %v1001 = vadd.f32 0.0, %v1000
        %v1002 = vpop.f32.mrf.mxu0
        %v1003 = vadd.f32 0.0, %v1002
        %v1004 = vpop.f32.mrf.mxu0
        %v1005 = vadd.f32 0.0, %v1004
        %v1006 = vpop.f32.mrf.mxu0
        %v1007 = vadd.f32 0.0, %v1006
        %1008 = vmatprep.mubr.bf16.mxu0 0
        %1009 = vmatmul.mubr.bf16.gmra.mxu0 %v392
        %v1010 = vpop.f32.mrf.mxu0
        %v1011 = vadd.f32 0.0, %v1010
        %v1012 = vpop.f32.mrf.mxu0
        %v1013 = vadd.f32 0.0, %v1012
        %v1014 = vpop.f32.mrf.mxu0
        %v1015 = vadd.f32 0.0, %v1014
        %v1016 = vpop.f32.mrf.mxu0
        %v1017 = vadd.f32 0.0, %v1016
        %1018 = vmatprep.mubr.bf16.mxu0 0
        %1019 = vmatmul.mubr.bf16.gmra.mxu0 %v395
        %v1020 = vpop.f32.mrf.mxu0
        %v1021 = vadd.f32 0.0, %v1020
        %v1022 = vpop.f32.mrf.mxu0
        %v1023 = vadd.f32 0.0, %v1022
        %v1024 = vpop.f32.mrf.mxu0
        %v1025 = vadd.f32 0.0, %v1024
        %v1026 = vpop.f32.mrf.mxu0
        %v1027 = vadd.f32 0.0, %v1026
        %1028 = vmatprep.mubr.bf16.mxu0 0
        %1029 = vmatmul.mubr.bf16.gmra.mxu0 %v398
        %v1030 = vpop.f32.mrf.mxu0
        %v1031 = vadd.f32 0.0, %v1030
        %v1032 = vpop.f32.mrf.mxu0
        %v1033 = vadd.f32 0.0, %v1032
        %v1034 = vpop.f32.mrf.mxu0
        %v1035 = vadd.f32 0.0, %v1034
        %v1036 = vpop.f32.mrf.mxu0
        %v1037 = vadd.f32 0.0, %v1036
        %1038 = vdwg.mxu0
        %v1039 = vmax.f32 %v1001, 0.0
        %v1040 = vmax.f32 %v1003, 0.0
        %v1041 = vmax.f32 %v1005, 0.0
        %v1042 = vmax.f32 %v1007, 0.0
        %v1043 = vmax.f32 %v1011, 0.0
        %v1044 = vmax.f32 %v1013, 0.0
        %v1045 = vmax.f32 %v1015, 0.0
        %v1046 = vmax.f32 %v1017, 0.0
        %v1047 = vmax.f32 %v1021, 0.0
        %v1048 = vmax.f32 %v1023, 0.0
        %v1049 = vmax.f32 %v1025, 0.0
        %v1050 = vmax.f32 %v1027, 0.0
        %v1051 = vmax.f32 %v1031, 0.0
        %v1052 = vmax.f32 %v1033, 0.0
        %v1053 = vmax.f32 %v1035, 0.0
        %v1054 = vmax.f32 %v1037, 0.0
        %v1055 = vmul.f32 %v1039, %v492
        %v1056 = vmul.f32 %v1040, %v492
        %v1057 = vmul.f32 %v1041, %v497
        %v1058 = vmul.f32 %v1042, %v497
        %v1059 = vmul.f32 %v1043, %v502
        %v1060 = vmul.f32 %v1044, %v502
        %v1061 = vmul.f32 %v1045, %v507
        %v1062 = vmul.f32 %v1046, %v507
        %v1063 = vmul.f32 %v1047, %v512
        %v1064 = vmul.f32 %v1048, %v512
        %v1065 = vmul.f32 %v1049, %v517
        %v1066 = vmul.f32 %v1050, %v517
        %v1067 = vmul.f32 %v1051, %v522
        %v1068 = vmul.f32 %v1052, %v522
        %v1069 = vmul.f32 %v1053, %v527
        %v1070 = vmul.f32 %v1054, %v527
        %v1071 = vadd.f32 %v1055, %v1057
        %v1072 = vadd.f32 %v1071, %v1059
        %v1073 = vadd.f32 %v1072, %v1061
        %v1074 = vadd.f32 %v1073, %v1063
        %v1075 = vadd.f32 %v1074, %v1065
        %v1076 = vadd.f32 %v1075, %v1067
        %v1077 = vadd.f32 %v1076, %v1069
        %v1078 = vrot.slane %v1077, 4
        %v1079 = vadd.f32 %v1077, %v1078
        %v1080 = vrot.slane %v1079, 2
        %v1081 = vadd.f32 %v1079, %v1080
        %v1082 = vrot.slane %v1081, 1
        %v1083 = vadd.f32 %v1081, %v1082
        %v1084 = vadd.f32 %v1056, %v1058
        %v1085 = vadd.f32 %v1084, %v1060
        %v1086 = vadd.f32 %v1085, %v1062
        %v1087 = vadd.f32 %v1086, %v1064
        %v1088 = vadd.f32 %v1087, %v1066
        %v1089 = vadd.f32 %v1088, %v1068
        %v1090 = vadd.f32 %v1089, %v1070
        %v1091 = vrot.slane %v1090, 4
        %v1092 = vadd.f32 %v1090, %v1091
        %v1093 = vrot.slane %v1092, 2
        %v1094 = vadd.f32 %v1092, %v1093
        %v1095 = vrot.slane %v1094, 1
        %v1096 = vadd.f32 %v1094, %v1095
        %v1097 = vmax.f32 %v1083, 0.0
        %v1098 = vmax.f32 %v1096, 0.0
        %v1101 = vcombine.low %v1097, %v1098
        %v1103 = vunpack.c.l.s4 1966171168
        %v1104 = vunpack.c.0.s8 %v1103
        %v1105 = vlaneseq
        %v1106 = vshrl.u32 %v1105, 7
        %v1107 = vsub.s32 %v1104, %v1106
        %v1108 = vrot.slane %v1101, %v1107
        %v1110 = vunpack.c.l.s4 1966171168
        %v1111 = vunpack.c.0.s8 %v1110
        %v1112 = vlaneseq
        %v1113 = vshrl.u32 %v1112, 7
        %v1114 = vsub.s32 %v1111, %v1113
        %v1115 = vrot.slane %v1108, %v1114
        %1117 = vst.msk [vmem:[%s191 + $0x4] sm:$0x3] %vm594, %v1115
        %v1118 = vld [vmem:[%s196 + $0x18] sm:$0xff]
        %v1120 = vunpack.c.l.b16 %v1118
        %v1121 = vunpack.c.h.b16 %v1118
        %v1122 = vpack.c.b16 %v1120, %v1120
        %v1123 = vpack.c.b16 %v1121, %v1121
        %v1125 = vsel %vm263, %v1122, 0
        %v1128 = vsel %vm263, %v1123, 0
        %1130 = vmatprep.subr.bf16.mxu0 0
        %1131 = vmatpush1.bf16.msra.mxu0 0
        %1132 = vmatprep.subr.bf16.mxu0 0
        %1133 = vmatpush1.bf16.msra.mxu0 0
        %1134 = vmatprep.subr.bf16.mxu0 0
        %1135 = vmatpush1.bf16.msra.mxu0 0
        %1136 = vmatprep.subr.bf16.mxu0 0
        %1137 = vmatpush1.bf16.msra.mxu0 0
        %1138 = vmatprep.subr.bf16.mxu0 0
        %1139 = vmatpush1.bf16.msra.mxu0 0
        %1140 = vmatprep.subr.bf16.mxu0 0
        %1141 = vmatpush1.bf16.msra.mxu0 0
        %1142 = vmatprep.subr.bf16.mxu0 0
        %1143 = vmatpush1.bf16.msra.mxu0 0
        %1144 = vmatprep.subr.bf16.mxu0 %v1128
        %1145 = vmatpush1.bf16.msra.mxu0 %v1125
        %1146 = vmatprep.subr.bf16.mxu0 0
        %1147 = vmatpush2.bf16.msra.mxu0 0
        %1148 = vmatprep.subr.bf16.mxu0 0
        %1149 = vmatpush2.bf16.msra.mxu0 0
        %1150 = vmatprep.subr.bf16.mxu0 0
        %1151 = vmatpush2.bf16.msra.mxu0 0
        %1152 = vmatprep.subr.bf16.mxu0 0
        %1153 = vmatpush2.bf16.msra.mxu0 0
        %1154 = vmatprep.subr.bf16.mxu0 0
        %1155 = vmatpush2.bf16.msra.mxu0 0
        %1156 = vmatprep.subr.bf16.mxu0 0
        %1157 = vmatpush2.bf16.msra.mxu0 0
        %1158 = vmatprep.subr.bf16.mxu0 0
        %1159 = vmatpush2.bf16.msra.mxu0 0
        %1160 = vmatprep.subr.bf16.mxu0 0
        %1161 = vmatpush2.bf16.msra.mxu0 0
        %1162 = vmatprep.mubr.bf16.mxu0 0
        %1163 = vmatmul.mubr.bf16.gmra.mxu0 %v252
        %v1164 = vpop.f32.mrf.mxu0
        %v1165 = vadd.f32 0.0, %v1164
        %v1166 = vpop.f32.mrf.mxu0
        %v1167 = vadd.f32 0.0, %v1166
        %v1168 = vpop.f32.mrf.mxu0
        %v1169 = vadd.f32 0.0, %v1168
        %v1170 = vpop.f32.mrf.mxu0
        %v1171 = vadd.f32 0.0, %v1170
        %1172 = vmatprep.mubr.bf16.mxu0 0
        %1173 = vmatmul.mubr.bf16.gmra.mxu0 %v255
        %v1174 = vpop.f32.mrf.mxu0
        %v1175 = vadd.f32 0.0, %v1174
        %v1176 = vpop.f32.mrf.mxu0
        %v1177 = vadd.f32 0.0, %v1176
        %v1178 = vpop.f32.mrf.mxu0
        %v1179 = vadd.f32 0.0, %v1178
        %v1180 = vpop.f32.mrf.mxu0
        %v1181 = vadd.f32 0.0, %v1180
        %1182 = vmatprep.mubr.bf16.mxu0 0
        %1183 = vmatmul.mubr.bf16.gmra.mxu0 %v258
        %v1184 = vpop.f32.mrf.mxu0
        %v1185 = vadd.f32 0.0, %v1184
        %v1186 = vpop.f32.mrf.mxu0
        %v1187 = vadd.f32 0.0, %v1186
        %v1188 = vpop.f32.mrf.mxu0
        %v1189 = vadd.f32 0.0, %v1188
        %v1190 = vpop.f32.mrf.mxu0
        %v1191 = vadd.f32 0.0, %v1190
        %1192 = vmatprep.mubr.bf16.mxu0 0
        %1193 = vmatmul.mubr.bf16.gmra.mxu0 %v261
        %v1194 = vpop.f32.mrf.mxu0
        %v1195 = vadd.f32 0.0, %v1194
        %v1196 = vpop.f32.mrf.mxu0
        %v1197 = vadd.f32 0.0, %v1196
        %v1198 = vpop.f32.mrf.mxu0
        %v1199 = vadd.f32 0.0, %v1198
        %v1200 = vpop.f32.mrf.mxu0
        %v1201 = vadd.f32 0.0, %v1200
        %1202 = vdwg.mxu0
        %v1203 = vmax.f32 %v1165, 0.0
        %v1204 = vmax.f32 %v1167, 0.0
        %v1205 = vmax.f32 %v1169, 0.0
        %v1206 = vmax.f32 %v1171, 0.0
        %v1207 = vmax.f32 %v1175, 0.0
        %v1208 = vmax.f32 %v1177, 0.0
        %v1209 = vmax.f32 %v1179, 0.0
        %v1210 = vmax.f32 %v1181, 0.0
        %v1211 = vmax.f32 %v1185, 0.0
        %v1212 = vmax.f32 %v1187, 0.0
        %v1213 = vmax.f32 %v1189, 0.0
        %v1214 = vmax.f32 %v1191, 0.0
        %v1215 = vmax.f32 %v1195, 0.0
        %v1216 = vmax.f32 %v1197, 0.0
        %v1217 = vmax.f32 %v1199, 0.0
        %v1218 = vmax.f32 %v1201, 0.0
        %v1219 = vpack.c.bf16 %v1205, %v1203
        %v1220 = vpack.c.bf16 %v1206, %v1204
        %v1221 = vpack.c.bf16 %v1209, %v1207
        %v1222 = vpack.c.bf16 %v1210, %v1208
        %v1223 = vpack.c.bf16 %v1213, %v1211
        %v1224 = vpack.c.bf16 %v1214, %v1212
        %v1225 = vpack.c.bf16 %v1217, %v1215
        %v1226 = vpack.c.bf16 %v1218, %v1216
        %1227 = vmatprep.subr.bf16.mxu0 0
        %1228 = vmatpush1.bf16.msra.mxu0 0
        %1229 = vmatprep.subr.bf16.mxu0 0
        %1230 = vmatpush1.bf16.msra.mxu0 0
        %1231 = vmatprep.subr.bf16.mxu0 0
        %1232 = vmatpush1.bf16.msra.mxu0 0
        %1233 = vmatprep.subr.bf16.mxu0 0
        %1234 = vmatpush1.bf16.msra.mxu0 0
        %1235 = vmatprep.subr.bf16.mxu0 %v1226
        %1236 = vmatpush1.bf16.msra.mxu0 %v1225
        %1237 = vmatprep.subr.bf16.mxu0 %v1224
        %1238 = vmatpush1.bf16.msra.mxu0 %v1223
        %1239 = vmatprep.subr.bf16.mxu0 %v1222
        %1240 = vmatpush1.bf16.msra.mxu0 %v1221
        %1241 = vmatprep.subr.bf16.mxu0 %v1220
        %1242 = vmatpush1.bf16.msra.mxu0 %v1219
        %1243 = vmatprep.subr.bf16.mxu0 0
        %1244 = vmatpush2.bf16.msra.mxu0 0
        %1245 = vmatprep.subr.bf16.mxu0 0
        %1246 = vmatpush2.bf16.msra.mxu0 0
        %1247 = vmatprep.subr.bf16.mxu0 0
        %1248 = vmatpush2.bf16.msra.mxu0 0
        %1249 = vmatprep.subr.bf16.mxu0 0
        %1250 = vmatpush2.bf16.msra.mxu0 0
        %1251 = vmatprep.subr.bf16.mxu0 0
        %1252 = vmatpush2.bf16.msra.mxu0 0
        %1253 = vmatprep.subr.bf16.mxu0 0
        %1254 = vmatpush2.bf16.msra.mxu0 0
        %1255 = vmatprep.subr.bf16.mxu0 0
        %1256 = vmatpush2.bf16.msra.mxu0 0
        %1257 = vmatprep.subr.bf16.mxu0 0
        %1258 = vmatpush2.bf16.msra.mxu0 0
        %1259 = vmatprep.mubr.bf16.mxu0 0
        %1260 = vmatmul.mubr.bf16.gmra.mxu0 %v389
        %v1261 = vpop.f32.mrf.mxu0
        %v1262 = vadd.f32 0.0, %v1261
        %v1263 = vpop.f32.mrf.mxu0
        %v1264 = vadd.f32 0.0, %v1263
        %v1265 = vpop.f32.mrf.mxu0
        %v1266 = vadd.f32 0.0, %v1265
        %v1267 = vpop.f32.mrf.mxu0
        %v1268 = vadd.f32 0.0, %v1267
        %1269 = vmatprep.mubr.bf16.mxu0 0
        %1270 = vmatmul.mubr.bf16.gmra.mxu0 %v392
        %v1271 = vpop.f32.mrf.mxu0
        %v1272 = vadd.f32 0.0, %v1271
        %v1273 = vpop.f32.mrf.mxu0
        %v1274 = vadd.f32 0.0, %v1273
        %v1275 = vpop.f32.mrf.mxu0
        %v1276 = vadd.f32 0.0, %v1275
        %v1277 = vpop.f32.mrf.mxu0
        %v1278 = vadd.f32 0.0, %v1277
        %1279 = vmatprep.mubr.bf16.mxu0 0
        %1280 = vmatmul.mubr.bf16.gmra.mxu0 %v395
        %v1281 = vpop.f32.mrf.mxu0
        %v1282 = vadd.f32 0.0, %v1281
        %v1283 = vpop.f32.mrf.mxu0
        %v1284 = vadd.f32 0.0, %v1283
        %v1285 = vpop.f32.mrf.mxu0
        %v1286 = vadd.f32 0.0, %v1285
        %v1287 = vpop.f32.mrf.mxu0
        %v1288 = vadd.f32 0.0, %v1287
        %1289 = vmatprep.mubr.bf16.mxu0 0
        %1290 = vmatmul.mubr.bf16.gmra.mxu0 %v398
        %v1291 = vpop.f32.mrf.mxu0
        %v1292 = vadd.f32 0.0, %v1291
        %v1293 = vpop.f32.mrf.mxu0
        %v1294 = vadd.f32 0.0, %v1293
        %v1295 = vpop.f32.mrf.mxu0
        %v1296 = vadd.f32 0.0, %v1295
        %v1297 = vpop.f32.mrf.mxu0
        %v1298 = vadd.f32 0.0, %v1297
        %1299 = vdwg.mxu0
        %v1300 = vmax.f32 %v1262, 0.0
        %v1301 = vmax.f32 %v1264, 0.0
        %v1302 = vmax.f32 %v1266, 0.0
        %v1303 = vmax.f32 %v1268, 0.0
        %v1304 = vmax.f32 %v1272, 0.0
        %v1305 = vmax.f32 %v1274, 0.0
        %v1306 = vmax.f32 %v1276, 0.0
        %v1307 = vmax.f32 %v1278, 0.0
        %v1308 = vmax.f32 %v1282, 0.0
        %v1309 = vmax.f32 %v1284, 0.0
        %v1310 = vmax.f32 %v1286, 0.0
        %v1311 = vmax.f32 %v1288, 0.0
        %v1312 = vmax.f32 %v1292, 0.0
        %v1313 = vmax.f32 %v1294, 0.0
        %v1314 = vmax.f32 %v1296, 0.0
        %v1315 = vmax.f32 %v1298, 0.0
        %v1316 = vmul.f32 %v1300, %v492
        %v1317 = vmul.f32 %v1301, %v492
        %v1318 = vmul.f32 %v1302, %v497
        %v1319 = vmul.f32 %v1303, %v497
        %v1320 = vmul.f32 %v1304, %v502
        %v1321 = vmul.f32 %v1305, %v502
        %v1322 = vmul.f32 %v1306, %v507
        %v1323 = vmul.f32 %v1307, %v507
        %v1324 = vmul.f32 %v1308, %v512
        %v1325 = vmul.f32 %v1309, %v512
        %v1326 = vmul.f32 %v1310, %v517
        %v1327 = vmul.f32 %v1311, %v517
        %v1328 = vmul.f32 %v1312, %v522
        %v1329 = vmul.f32 %v1313, %v522
        %v1330 = vmul.f32 %v1314, %v527
        %v1331 = vmul.f32 %v1315, %v527
        %v1332 = vadd.f32 %v1316, %v1318
        %v1333 = vadd.f32 %v1332, %v1320
        %v1334 = vadd.f32 %v1333, %v1322
        %v1335 = vadd.f32 %v1334, %v1324
        %v1336 = vadd.f32 %v1335, %v1326
        %v1337 = vadd.f32 %v1336, %v1328
        %v1338 = vadd.f32 %v1337, %v1330
        %v1339 = vrot.slane %v1338, 4
        %v1340 = vadd.f32 %v1338, %v1339
        %v1341 = vrot.slane %v1340, 2
        %v1342 = vadd.f32 %v1340, %v1341
        %v1343 = vrot.slane %v1342, 1
        %v1344 = vadd.f32 %v1342, %v1343
        %v1345 = vadd.f32 %v1317, %v1319
        %v1346 = vadd.f32 %v1345, %v1321
        %v1347 = vadd.f32 %v1346, %v1323
        %v1348 = vadd.f32 %v1347, %v1325
        %v1349 = vadd.f32 %v1348, %v1327
        %v1350 = vadd.f32 %v1349, %v1329
        %v1351 = vadd.f32 %v1350, %v1331
        %v1352 = vrot.slane %v1351, 4
        %v1353 = vadd.f32 %v1351, %v1352
        %v1354 = vrot.slane %v1353, 2
        %v1355 = vadd.f32 %v1353, %v1354
        %v1356 = vrot.slane %v1355, 1
        %v1357 = vadd.f32 %v1355, %v1356
        %v1358 = vmax.f32 %v1344, 0.0
        %v1359 = vmax.f32 %v1357, 0.0
        %v1362 = vcombine.low %v1358, %v1359
        %v1364 = vunpack.c.l.s4 1966171168
        %v1365 = vunpack.c.0.s8 %v1364
        %v1366 = vlaneseq
        %v1367 = vshrl.u32 %v1366, 7
        %v1368 = vsub.s32 %v1365, %v1367
        %v1369 = vrot.slane %v1362, %v1368
        %v1371 = vunpack.c.l.s4 1966171168
        %v1372 = vunpack.c.0.s8 %v1371
        %v1373 = vlaneseq
        %v1374 = vshrl.u32 %v1373, 7
        %v1375 = vsub.s32 %v1372, %v1374
        %v1376 = vrot.slane %v1369, %v1375
        %1378 = vst.msk [vmem:[%s191 + $0x6] sm:$0x3] %vm594, %v1376
        %s1379 = sand.u32 %s115, 1
        %s1380 = scalar_lea.sflag [#allocation3], %s1379
        %s1381 = sand.u32 %s115, 1
        %s1382 = smul.addr %s1381, 8
        %s1383 = scalar_lea.vmem [#allocation2], %s1382
        // Predicated region
        $region37: #{nerf_small_forward.1} parent=35 // pred_check
          %p1384 = pneg %p125
        $region38: #{nerf_small_forward.1} parent=35 // pred_check_branch
          %1386 = sbr.rel (%p1384) target = $region40
        $region39: #{nerf_small_forward.1} parent=35 // pred_region
          %s1387 = smul.u32 8, %s18
          %s1389 = ssub.s32 128, 128
          %1390 = vsyncadd %s1380, %s1389
          %s1391 = smul.addr %s1387, 16
          %s1392 = scalar_lea.hbm %s4, %s1391
          %s1394 = sshll.u32 %s1383, 4
          %s1395 = int_to_ptr.vmem [resolvable:$true] %s1394
          %1397 = dma.vmem_to_hbm [thread:$0]  %s1395, 128, %s1392, %s1380
        $region40: #{nerf_small_forward.1} parent=35 // pred_fallthru
          _
      $region36: #{nerf_small_forward.1} parent=5 // pred_fallthru
        _
      %p1398 = scmp.le.s32.totalorder 2, %s13
      // Predicated region
      $region41: #{nerf_small_forward.1} parent=5 // pred_check
        %p1399 = pneg %p1398
      $region42: #{nerf_small_forward.1} parent=5 // pred_check_branch
        %1401 = sbr.rel (%p1399) target = $region44
      $region43: #{nerf_small_forward.1} parent=5 // pred_region
        %s1402 = ssub.s32 %s13, 2
        // Predicated region
        $region45: #{nerf_small_forward.1} parent=43 // pred_check
          %p1403 = pneg %p131
        $region46: #{nerf_small_forward.1} parent=43 // pred_check_branch
          %1405 = sbr.rel (%p1403) target = $region48
        $region47: #{nerf_small_forward.1} parent=43 // pred_region
          %s1406 = sand.u32 %s116, 1
          %s1407 = scalar_lea.sflag [#allocation3], %s1406
          %s1408 = sand.u32 %s116, 1
          %s1409 = smul.addr %s1408, 8
          %s1410 = scalar_lea.vmem [#allocation2], %s1409
          %1411 = dma.done %s1407, 128
        $region48: #{nerf_small_forward.1} parent=43 // pred_fallthru
          _
      $region44: #{nerf_small_forward.1} parent=5 // pred_fallthru
        _
    $region6: #{nerf_small_forward.1} parent=1 // loop_footer
      %s17 = sadd.s32 1, %s13
    $region7: #{nerf_small_forward.1} parent=1 // loop_footer_branch
      %12 = sbr.rel target = $region3
    $region8: #{nerf_small_forward.1} parent=1 // loop_exit
      _
    %1412 = vsyncpa [#allocation3], 1
    %s1413 = scalar_lea.sflag [#allocation3], 1
    %1414 = vsyncpa %s1413, 1

</llo_original>
